<compile_context>
chip_gen: v5e
topology: v5e:2x2
jax: 0.10.0
libtpu: 0.0.40
codegen_flags: <defaults>
</compile_context>

<pallas_src>
import functools

import jax
import jax.numpy as jnp
from jax import lax
from jax.experimental import pallas as pl
from jax.experimental.pallas import tpu as pltpu


def _prompt_heads_kernel(x_ref, w_ref, b_ref, type_ref, cs_ref, *, C):
    """One grid step = one batch element.

    x_ref    : (1, L, H)  backbone logits for this batch element
    w_ref    : (H, C+1)   [head_w^T | cs_w^T]   (VMEM-resident across steps)
    b_ref    : (1, C+1)   [head_b   | cs_b  ]
    type_ref : (1, 1, C)  classification head output (mean-pooled)
    cs_ref   : (1, L, 1)  per-token cs head output (prompt token dropped in wrapper)
    """
    L = x_ref.shape[1]
    x = x_ref[0]                                                      # (L, H)

    # single fused MXU matmul for both heads
    y = jnp.dot(x, w_ref[...], preferred_element_type=jnp.float32)    # (L, C+1)
    y = y + b_ref[...]

    # AdaptiveAvgPool1d(1) + head  ==  mean over L of (logits @ head_w^T) + head_b
    type_ref[0] = (jnp.sum(y[:, :C], axis=0, keepdims=True)
                   * (1.0 / L)).astype(type_ref.dtype)                # (1, C)
    # cs head: the last fused output column, one value per token
    cs_ref[0] = y[:, C:].astype(cs_ref.dtype)                         # (L, 1)


def custom_prompt_heads(logits, head_w, head_b, cs_w, cs_b):
    """logits: (B, L, H) f32; weights in PyTorch nn.Linear layout.

    Returns (type_probab (B, C), cs_pred (B, L-1)).
    """
    B, L, H = logits.shape
    C = head_w.shape[0]

    # glue: fuse the two heads along the output-channel (lane) axis
    w_comb = jnp.concatenate([head_w.T, cs_w.T], axis=1)              # (H, C+1)
    b_comb = jnp.concatenate([head_b, cs_b]).reshape(1, C + 1)        # (1, C+1)

    type_out, cs_out = pl.pallas_call(
        functools.partial(_prompt_heads_kernel, C=C),
        out_shape=(
            jax.ShapeDtypeStruct((B, 1, C), logits.dtype),
            jax.ShapeDtypeStruct((B, L, 1), logits.dtype),
        ),
        grid_spec=pltpu.PrefetchScalarGridSpec(
            num_scalar_prefetch=0,
            grid=(B,),
            in_specs=[
                pl.BlockSpec((1, L, H), lambda b: (b, 0, 0)),         # logits[b]
                pl.BlockSpec((H, C + 1), lambda b: (0, 0)),           # fused weights (shared)
                pl.BlockSpec((1, C + 1), lambda b: (0, 0)),           # fused biases  (shared)
            ],
            out_specs=(
                pl.BlockSpec((1, 1, C), lambda b: (b, 0, 0)),
                pl.BlockSpec((1, L, 1), lambda b: (b, 0, 0)),
            ),
        ),
        compiler_params=pltpu.CompilerParams(
            dimension_semantics=("parallel",)),
    )(logits, w_comb, b_comb)

    type_probab = type_out[:, 0, :]       # (B, C)
    cs_pred = cs_out[:, 1:, 0]            # drop the with_prompt_num=1 prompt token
    return type_probab, cs_pred


def reference(logits, head_w, head_b, cs_w, cs_b):
    """Pure-JAX reference following the PyTorch module's op order."""
    pooled = jnp.mean(logits, axis=1)                                 # AdaptiveAvgPool1d(1)
    type_probab = jnp.dot(pooled, head_w.T,
                          precision=lax.Precision.HIGHEST) + head_b
    cs = jnp.einsum('blh,oh->blo', logits, cs_w,
                    precision=lax.Precision.HIGHEST)[..., 0] + cs_b[0]
    return type_probab, cs[:, 1:]


if __name__ == "__main__":
    key = jax.random.PRNGKey(0)
    B, seq, H, C = 2, 8, 1280, 10          # H=1280 is fixed by the module's nn.Linear(1280, .)
    L = seq + 1                            # +1 prompt token (with_prompt_num=1)

    k0, k1, k2, k3, k4 = jax.random.split(key, 5)
    # synthetic stand-in for self.pretrain(...)['logits']
    logits = jax.random.normal(k0, (B, L, H), dtype=jnp.float32)
    lim = 1.0 / H ** 0.5                   # nn.Linear default-style uniform init
    head_w = jax.random.uniform(k1, (C, H), minval=-lim, maxval=lim, dtype=jnp.float32)
    head_b = jax.random.uniform(k2, (C,), minval=-lim, maxval=lim, dtype=jnp.float32)
    cs_w = jax.random.uniform(k3, (1, H), minval=-lim, maxval=lim, dtype=jnp.float32)
    cs_b = jax.random.uniform(k4, (1,), minval=-lim, maxval=lim, dtype=jnp.float32)

    type_probab, cs_pred = custom_prompt_heads(logits, head_w, head_b, cs_w, cs_b)
    type_probab, cs_pred = jax.block_until_ready((type_probab, cs_pred))

    ref_type, ref_cs = reference(logits, head_w, head_b, cs_w, cs_b)
    assert type_probab.shape == (B, C), type_probab.shape
    assert cs_pred.shape == (B, L - 1), cs_pred.shape
    assert jnp.allclose(type_probab, ref_type, atol=1e-3, rtol=1e-3), \
        float(jnp.max(jnp.abs(type_probab - ref_type)))
    assert jnp.allclose(cs_pred, ref_cs, atol=1e-3, rtol=1e-3), \
        float(jnp.max(jnp.abs(cs_pred - ref_cs)))
    print("KERNEL_OK")
</pallas_src>

<mosaic_0001>
module attributes {stable_mosaic.version = 11 : i64} {
  func.func @_prompt_heads_kernel(%arg0: i32, %arg1: memref<1x9x1280xf32, #tpu.memory_space<vmem>>, %arg2: memref<1280x11xf32, #tpu.memory_space<vmem>>, %arg3: memref<1x11xf32, #tpu.memory_space<vmem>>, %arg4: memref<1x1x10xf32, #tpu.memory_space<vmem>>, %arg5: memref<1x9x1xf32, #tpu.memory_space<vmem>>) attributes {dimension_semantics = [#tpu.dimension_semantics<parallel>], iteration_bounds = array<i64: 2>, scalar_prefetch = 0 : i64, scratch_operands = 0 : i64, tpu.core_type = #tpu.core_type<tc>, window_params = [{transform_indices = @transform_0, window_bounds = array<i64: 1, 9, 1280>}, {pipeline_mode = #tpu.pipeline_mode<synchronous>, transform_indices = @transform_1, window_bounds = array<i64: 1280, 11>}, {pipeline_mode = #tpu.pipeline_mode<synchronous>, transform_indices = @transform_2, window_bounds = array<i64: 1, 11>}, {transform_indices = @transform_3, window_bounds = array<i64: 1, 1, 10>}, {transform_indices = @transform_4, window_bounds = array<i64: 1, 9, 1>}]} {
    %c0 = arith.constant 0 : index
    %c0_0 = arith.constant 0 : index
    %c0_1 = arith.constant 0 : index
    %0 = vector.load %arg1[%c0, %c0_0, %c0_1] : memref<1x9x1280xf32, #tpu.memory_space<vmem>>, vector<1x9x1280xf32>
    %1 = vector.shape_cast %0 : vector<1x9x1280xf32> to vector<9x1280xf32>
    %c0_2 = arith.constant 0 : index
    %c0_3 = arith.constant 0 : index
    %2 = vector.load %arg2[%c0_2, %c0_3] : memref<1280x11xf32, #tpu.memory_space<vmem>>, vector<1280x11xf32>
    %cst = arith.constant dense<0.000000e+00> : vector<9x11xf32>
    %3 = tpu.matmul %1, %2, %cst {dimension_numbers = #tpu.dot_dimension_numbers<[1], [0], [0], [1], [0, 0, 1, 1], [], []>} : vector<9x1280xf32>, vector<1280x11xf32>, vector<9x11xf32> -> vector<9x11xf32>
    %c0_4 = arith.constant 0 : index
    %c0_5 = arith.constant 0 : index
    %4 = vector.load %arg3[%c0_4, %c0_5] : memref<1x11xf32, #tpu.memory_space<vmem>>, vector<1x11xf32>
    %5 = vector.broadcast %4 : vector<1x11xf32> to vector<9x11xf32>
    %6 = arith.addf %3, %5 : vector<9x11xf32>
    %7 = vector.extract_strided_slice %6 {offsets = [0, 0], sizes = [9, 10], strides = [1, 1]} : vector<9x11xf32> to vector<9x10xf32>
    %cst_6 = arith.constant dense<0.000000e+00> : vector<10xf32>
    %8 = vector.multi_reduction <add>, %7, %cst_6 [0] : vector<9x10xf32> to vector<10xf32>
    %9 = vector.shape_cast %8 : vector<10xf32> to vector<1x10xf32>
    %cst_7 = arith.constant 0.111111112 : f32
    %10 = vector.broadcast %cst_7 : f32 to vector<1x10xf32>
    %11 = arith.mulf %9, %10 : vector<1x10xf32>
    %c0_8 = arith.constant 0 : index
    %c0_9 = arith.constant 0 : index
    %c0_10 = arith.constant 0 : index
    %12 = vector.load %arg4[%c0_8, %c0_9, %c0_10] : memref<1x1x10xf32, #tpu.memory_space<vmem>>, vector<1x1x10xf32>
    %13 = vector.shape_cast %12 : vector<1x1x10xf32> to vector<1x10xf32>
    %14 = vector.shape_cast %11 : vector<1x10xf32> to vector<1x1x10xf32>
    tpu.vector_store %arg4[%c0_8, %c0_9, %c0_10], %14 {strides = array<i32>} : memref<1x1x10xf32, #tpu.memory_space<vmem>>, vector<1x1x10xf32>,
    %15 = vector.extract_strided_slice %6 {offsets = [0, 10], sizes = [9, 1], strides = [1, 1]} : vector<9x11xf32> to vector<9x1xf32>
    %c0_11 = arith.constant 0 : index
    %c0_12 = arith.constant 0 : index
    %c0_13 = arith.constant 0 : index
    %16 = vector.load %arg5[%c0_11, %c0_12, %c0_13] : memref<1x9x1xf32, #tpu.memory_space<vmem>>, vector<1x9x1xf32>
    %17 = vector.shape_cast %16 : vector<1x9x1xf32> to vector<9x1xf32>
    %18 = vector.shape_cast %15 : vector<9x1xf32> to vector<1x9x1xf32>
    tpu.vector_store %arg5[%c0_11, %c0_12, %c0_13], %18 {strides = array<i32>} : memref<1x9x1xf32, #tpu.memory_space<vmem>>, vector<1x9x1xf32>,
    return
  }
  func.func @transform_0(%arg0: i32) -> (i32, i32, i32) {
    %c0_i32 = arith.constant 0 : i32
    %c0_i32_0 = arith.constant 0 : i32
    %c0_i32_1 = arith.constant 0 : i32
    return %arg0, %c0_i32, %c0_i32_0 : i32, i32, i32
  }
  func.func @transform_1(%arg0: i32) -> (i32, i32) {
    %c0_i32 = arith.constant 0 : i32
    %c0_i32_0 = arith.constant 0 : i32
    %c0_i32_1 = arith.constant 0 : i32
    return %c0_i32, %c0_i32_0 : i32, i32
  }
  func.func @transform_2(%arg0: i32) -> (i32, i32) {
    %c0_i32 = arith.constant 0 : i32
    %c0_i32_0 = arith.constant 0 : i32
    %c0_i32_1 = arith.constant 0 : i32
    return %c0_i32, %c0_i32_0 : i32, i32
  }
  func.func @transform_3(%arg0: i32) -> (i32, i32, i32) {
    %c0_i32 = arith.constant 0 : i32
    %c0_i32_0 = arith.constant 0 : i32
    %c0_i32_1 = arith.constant 0 : i32
    return %arg0, %c0_i32, %c0_i32_0 : i32, i32, i32
  }
  func.func @transform_4(%arg0: i32) -> (i32, i32, i32) {
    %c0_i32 = arith.constant 0 : i32
    %c0_i32_0 = arith.constant 0 : i32
    %c0_i32_1 = arith.constant 0 : i32
    return %arg0, %c0_i32, %c0_i32_0 : i32, i32, i32
  }
}

</mosaic_0001>

<llo_original>
// kernel: tpu_custom_call.1
$region0: #{tpu_custom_call.1}
  #allocation0 [shape = 'u32[]', space=smem, size = 0x4, offset = 0x4, fixed_abs, tag = 'smem constant byte address 0x4 - core index']
  #allocation1 [shape = 'u32[72,128]{1,0:T(1,128)}', space=vmem, size = 0x9000, scoped, tag = 'internal scratch']
  %s0 = inlined_call_operand.vmem [shape: f32[2,9,1280], index: 0, kind: input, shape index: {}]
  %s1 = inlined_call_operand.vmem [shape: f32[1280,11], index: 1, kind: input, shape index: {}]
  %s2 = inlined_call_operand.vmem [shape: f32[1,11], index: 2, kind: input, shape index: {}]
  %s3 = inlined_call_operand.hbm [shape: f32[2,1,10], index: 3, kind: output, shape index: {0}]
  %s4 = inlined_call_operand.vmem [shape: f32[2,9,1], index: 4, kind: output, shape index: {1}]
  %5 = xla_tuple %s3, %s4
  %s6 = sld [smem:[#allocation0]]
  $region53: #{tpu_custom_call.1} parent=0
    _
  %s8 = ssub.s32 1, %s6
  %s9 = scalar_select 0, %s8, %s6
  $region1: #{tpu_custom_call.1} parent=0
    #allocation2 [shape = 'u8[1024]{0}', space=vmem, size = 0x400, scoped, tag = 'output window, operand 0']
    #allocation3 [shape = 's32[2]{0}', space=sflag, size = 0x8, scoped, tag = 'scoped memory for tpu_custom_call.1']
    %10 = vsyncpa [#allocation3], 0
    %s11 = scalar_lea.sflag [#allocation3], 1
    %12 = vsyncpa %s11, 0
    loop: start=0, step=1, limit=4
    $region2: #{tpu_custom_call.1} parent=1 // loop_pre_header
      _
    $region3: #{tpu_custom_call.1} parent=1 // loop_header
      %s14 = sphi 0, %s18
      %p15 = scmp.ge.s32.totalorder %s14, 4
      %s24 = sphi 0, %s26
      %s27 = sphi 0, %s24
      %s28 = sphi 0, %s27
      %s44 = sphi 0, %s28
      %s48 = sphi 0, %s48
      %s50 = sphi 0, %s48
      %s51 = sphi 0, %s50
      %s65 = sphi 0, %s51
      %s69 = sphi 0, %s69
      %s71 = sphi 0, %s69
      %s72 = sphi 0, %s71
      %s86 = sphi 0, %s72
      %s92 = sphi 0, %s94
      %s95 = sphi 0, %s92
      %s96 = sphi 0, %s95
      %s112 = sphi 0, %s96
      %s118 = sphi 0, %s120
      %s121 = sphi 0, %s118
      %s122 = sphi 0, %s121
      %s138 = sphi 0, %s122
    $region4: #{tpu_custom_call.1} parent=1 // loop_header_branch
      %17 = sbr.rel (%p15) target = $region8
    $region5: #{tpu_custom_call.1} parent=1 // loop_body
      %s19 = ssub.s32 %s14, 1
      %s20 = ssub.s32 %s14, 2
      %s21 = sadd.s32 %s14, 1
      %s22 = ssub.s32 %s14, %s21
      %p23 = scmp.eq.s32.totalorder %s22, 0
      %s25 = sadd.s32 %s24, 1
      %s26 = scalar_select %p23, %s24, %s25
      %p29 = pneg %p23
      %p30 = scmp.eq.s32.totalorder %s14, 1
      %p31 = por %p29, %p30
      %p32 = scmp.ne.s32.totalorder %s24, %s27
      %p33 = scmp.eq.s32.totalorder %s14, 0
      %p34 = por %p32, %p33
      %p35 = scmp.ne.s32.totalorder %s24, %s27
      %p36 = scmp.eq.s32.totalorder %s19, 1
      %p37 = por %p35, %p36
      %p38 = scmp.ne.s32.totalorder %s27, %s28
      %p39 = scmp.eq.s32.totalorder %s19, 0
      %p40 = por %p38, %p39
      %p41 = scmp.ne.s32.totalorder %s27, %s28
      %p42 = scmp.eq.s32.totalorder %s20, 1
      %p43 = por %p41, %p42
      %p45 = scmp.ne.s32.totalorder %s28, %s44
      %p46 = scmp.eq.s32.totalorder %s20, 0
      %p47 = por %p45, %p46
      %s49 = sadd.s32 %s48, 1
      %p52 = scmp.eq.s32.totalorder %s14, 1
      %p53 = scmp.ne.s32.totalorder %s48, %s50
      %p54 = scmp.eq.s32.totalorder %s14, 0
      %p55 = por %p53, %p54
      %p56 = scmp.ne.s32.totalorder %s48, %s50
      %p57 = scmp.eq.s32.totalorder %s19, 1
      %p58 = por %p56, %p57
      %p59 = scmp.ne.s32.totalorder %s50, %s51
      %p60 = scmp.eq.s32.totalorder %s19, 0
      %p61 = por %p59, %p60
      %p62 = scmp.ne.s32.totalorder %s50, %s51
      %p63 = scmp.eq.s32.totalorder %s20, 1
      %p64 = por %p62, %p63
      %p66 = scmp.ne.s32.totalorder %s51, %s65
      %p67 = scmp.eq.s32.totalorder %s20, 0
      %p68 = por %p66, %p67
      %s70 = sadd.s32 %s69, 1
      %p73 = scmp.eq.s32.totalorder %s14, 1
      %p74 = scmp.ne.s32.totalorder %s69, %s71
      %p75 = scmp.eq.s32.totalorder %s14, 0
      %p76 = por %p74, %p75
      %p77 = scmp.ne.s32.totalorder %s69, %s71
      %p78 = scmp.eq.s32.totalorder %s19, 1
      %p79 = por %p77, %p78
      %p80 = scmp.ne.s32.totalorder %s71, %s72
      %p81 = scmp.eq.s32.totalorder %s19, 0
      %p82 = por %p80, %p81
      %p83 = scmp.ne.s32.totalorder %s71, %s72
      %p84 = scmp.eq.s32.totalorder %s20, 1
      %p85 = por %p83, %p84
      %p87 = scmp.ne.s32.totalorder %s72, %s86
      %p88 = scmp.eq.s32.totalorder %s20, 0
      %p89 = por %p87, %p88
      %s90 = ssub.s32 %s14, %s21
      %p91 = scmp.eq.s32.totalorder %s90, 0
      %s93 = sadd.s32 %s92, 1
      %s94 = scalar_select %p91, %s92, %s93
      %p97 = pneg %p91
      %p98 = scmp.eq.s32.totalorder %s14, 1
      %p99 = por %p97, %p98
      %p100 = scmp.ne.s32.totalorder %s92, %s95
      %p101 = scmp.eq.s32.totalorder %s14, 0
      %p102 = por %p100, %p101
      %p103 = scmp.ne.s32.totalorder %s92, %s95
      %p104 = scmp.eq.s32.totalorder %s19, 1
      %p105 = por %p103, %p104
      %p106 = scmp.ne.s32.totalorder %s95, %s96
      %p107 = scmp.eq.s32.totalorder %s19, 0
      %p108 = por %p106, %p107
      %p109 = scmp.ne.s32.totalorder %s95, %s96
      %p110 = scmp.eq.s32.totalorder %s20, 1
      %p111 = por %p109, %p110
      %p113 = scmp.ne.s32.totalorder %s96, %s112
      %p114 = scmp.eq.s32.totalorder %s20, 0
      %p115 = por %p113, %p114
      %s116 = ssub.s32 %s14, %s21
      %p117 = scmp.eq.s32.totalorder %s116, 0
      %s119 = sadd.s32 %s118, 1
      %s120 = scalar_select %p117, %s118, %s119
      %p123 = pneg %p117
      %p124 = scmp.eq.s32.totalorder %s14, 1
      %p125 = por %p123, %p124
      %p126 = scmp.ne.s32.totalorder %s118, %s121
      %p127 = scmp.eq.s32.totalorder %s14, 0
      %p128 = por %p126, %p127
      %p129 = scmp.ne.s32.totalorder %s118, %s121
      %p130 = scmp.eq.s32.totalorder %s19, 1
      %p131 = por %p129, %p130
      %p132 = scmp.ne.s32.totalorder %s121, %s122
      %p133 = scmp.eq.s32.totalorder %s19, 0
      %p134 = por %p132, %p133
      %p135 = scmp.ne.s32.totalorder %s121, %s122
      %p136 = scmp.eq.s32.totalorder %s20, 1
      %p137 = por %p135, %p136
      %p139 = scmp.ne.s32.totalorder %s122, %s138
      %p140 = scmp.eq.s32.totalorder %s20, 0
      %p141 = por %p139, %p140
      %p142 = scmp.le.s32.totalorder 1, %s14
      %p143 = scmp.lt.s32.totalorder %s14, 3
      %p144 = pnand %p142, %p143
      %p145 = pneg %p144
      // Predicated region
      $region9: #{tpu_custom_call.1} parent=5 // pred_check
        _
      $region10: #{tpu_custom_call.1} parent=5 // pred_check_branch
        %147 = sbr.rel (%p144) target = $region12
      $region11: #{tpu_custom_call.1} parent=5 // pred_region
        %s148 = ssub.s32 %s14, 1
        // Predicated region
        $region13: #{tpu_custom_call.1} parent=11 // pred_check
          %p149 = pneg %p61
        $region14: #{tpu_custom_call.1} parent=11 // pred_check_branch
          %151 = sbr.rel (%p149) target = $region16
        $region15: #{tpu_custom_call.1} parent=11 // pred_region
          _
        $region16: #{tpu_custom_call.1} parent=11 // pred_fallthru
          _
        // Predicated region
        $region17: #{tpu_custom_call.1} parent=11 // pred_check
          %p152 = pneg %p82
        $region18: #{tpu_custom_call.1} parent=11 // pred_check_branch
          %154 = sbr.rel (%p152) target = $region20
        $region19: #{tpu_custom_call.1} parent=11 // pred_region
          _
        $region20: #{tpu_custom_call.1} parent=11 // pred_fallthru
          _
      $region12: #{tpu_custom_call.1} parent=5 // pred_fallthru
        _
      %p155 = scmp.lt.s32.totalorder %s14, 2
      // Predicated region
      $region21: #{tpu_custom_call.1} parent=5 // pred_check
        %p156 = pneg %p155
      $region22: #{tpu_custom_call.1} parent=5 // pred_check_branch
        %158 = sbr.rel (%p156) target = $region24
      $region23: #{tpu_custom_call.1} parent=5 // pred_region
        // Predicated region
        $region25: #{tpu_custom_call.1} parent=23 // pred_check
          %p159 = pneg %p34
        $region26: #{tpu_custom_call.1} parent=23 // pred_check_branch
          %161 = sbr.rel (%p159) target = $region28
        $region27: #{tpu_custom_call.1} parent=23 // pred_region
          %p162 = scmp.lt.s32.totalorder %s14, 1
          %s163 = scalar_select %p162, %s14, 1
          %s164 = smul.addr %s163, 20
          %s165 = smul.addr %s164, 8
          %s166 = scalar_lea.vmem %s0, %s165
        $region28: #{tpu_custom_call.1} parent=23 // pred_fallthru
          _
      $region24: #{tpu_custom_call.1} parent=5 // pred_fallthru
        _
      %p167 = scmp.le.s32.totalorder 1, %s14
      %p168 = scmp.lt.s32.totalorder %s14, 3
      %p169 = pnand %p167, %p168
      %p170 = pneg %p169
      // Predicated region
      $region29: #{tpu_custom_call.1} parent=5 // pred_check
        _
      $region30: #{tpu_custom_call.1} parent=5 // pred_check_branch
        %172 = sbr.rel (%p169) target = $region32
      $region31: #{tpu_custom_call.1} parent=5 // pred_region
        %s173 = ssub.s32 %s14, 1
        %p174 = scmp.lt.s32.totalorder %s19, 1
        %s175 = scalar_select %p174, %s19, 1
        %s176 = smul.addr %s175, 20
        %s177 = smul.addr %s176, 8
        %s178 = scalar_lea.vmem %s0, %s177
        %p179 = pneg %p40
        %p180 = pneg %p37
        %p181 = pneg %p61
        %p182 = pneg %p58
        %p183 = pneg %p82
        %p184 = pneg %p79
        %p185 = pneg %p108
        %p186 = pneg %p105
        %s187 = sand.u32 %s95, 1
        %s188 = scalar_lea.sflag [#allocation3], %s187
        %s189 = sand.u32 %s95, 1
        %s190 = scalar_lea.vmem [#allocation2], %s189
        %p191 = pneg %p134
        %p192 = pneg %p131
        %p193 = scmp.lt.s32.totalorder %s19, 1
        %s194 = scalar_select %p193, %s19, 1
        %s195 = smul.addr %s194, 2
        %s196 = smul.addr %s195, 8
        %s197 = scalar_lea.vmem %s4, %s196
        %p198 = scmp.lt.s32.totalorder %s19, 1
        %s199 = scalar_select %p198, %s19, 1
        %s200 = smul.addr %s199, 20
        %s201 = smul.addr %s200, 8
        %s202 = scalar_lea.vmem %s0, %s201
        %p203 = scmp.lt.s32.totalorder %s19, 1
        %s204 = scalar_select %p203, %s19, 1
        %s205 = smul.addr %s204, 2
        %s206 = smul.addr %s205, 8
        %s207 = scalar_lea.vmem %s4, %s206
        %v208 = vld [vmem:[%s202] sm:$0xff]
        %v209 = vld [vmem:[%s202 + $0x8] sm:$0xff]
        %v210 = vld [vmem:[%s202 + $0x10] sm:$0xff]
        %v211 = vld [vmem:[%s202 + $0x18] sm:$0xff]
        %v212 = vld [vmem:[%s202 + $0x20] sm:$0xff]
        %v213 = vld [vmem:[%s202 + $0x28] sm:$0xff]
        %v214 = vld [vmem:[%s202 + $0x30] sm:$0xff]
        %v215 = vld [vmem:[%s202 + $0x38] sm:$0xff]
        %v216 = vld [vmem:[%s202 + $0x40] sm:$0xff]
        %v217 = vld [vmem:[%s202 + $0x48] sm:$0xff]
        %v218 = vld [vmem:[%s202 + $0x50] sm:$0x1]
        %v219 = vld [vmem:[%s202 + $0x58] sm:$0x1]
        %v220 = vld [vmem:[%s202 + $0x60] sm:$0x1]
        %v221 = vld [vmem:[%s202 + $0x68] sm:$0x1]
        %v222 = vld [vmem:[%s202 + $0x70] sm:$0x1]
        %v223 = vld [vmem:[%s202 + $0x78] sm:$0x1]
        %v224 = vld [vmem:[%s202 + $0x80] sm:$0x1]
        %v225 = vld [vmem:[%s202 + $0x88] sm:$0x1]
        %v226 = vld [vmem:[%s202 + $0x90] sm:$0x1]
        %v227 = vld [vmem:[%s202 + $0x98] sm:$0x1]
        %v228 = vld [vmem:[%s1] sm:$0xff]
        %v229 = vld [vmem:[%s1 + $0x8] sm:$0xff]
        %v230 = vld [vmem:[%s1 + $0x10] sm:$0xff]
        %v231 = vld [vmem:[%s1 + $0x18] sm:$0xff]
        %v232 = vld [vmem:[%s1 + $0x20] sm:$0xff]
        %v233 = vld [vmem:[%s1 + $0x28] sm:$0xff]
        %v234 = vld [vmem:[%s1 + $0x30] sm:$0xff]
        %v235 = vld [vmem:[%s1 + $0x38] sm:$0xff]
        %v236 = vld [vmem:[%s1 + $0x40] sm:$0xff]
        %v237 = vld [vmem:[%s1 + $0x48] sm:$0xff]
        %v238 = vld [vmem:[%s1 + $0x50] sm:$0xff]
        %v239 = vld [vmem:[%s1 + $0x58] sm:$0xff]
        %v240 = vld [vmem:[%s1 + $0x60] sm:$0xff]
        %v241 = vld [vmem:[%s1 + $0x68] sm:$0xff]
        %v242 = vld [vmem:[%s1 + $0x70] sm:$0xff]
        %v243 = vld [vmem:[%s1 + $0x78] sm:$0xff]
        %v244 = vld [vmem:[%s1 + $0x80] sm:$0xff]
        %v245 = vld [vmem:[%s1 + $0x88] sm:$0xff]
        %v246 = vld [vmem:[%s1 + $0x90] sm:$0xff]
        %v247 = vld [vmem:[%s1 + $0x98] sm:$0xff]
        %v248 = vld [vmem:[%s1 + $0xa0] sm:$0xff]
        %v249 = vld [vmem:[%s1 + $0xa8] sm:$0xff]
        %v250 = vld [vmem:[%s1 + $0xb0] sm:$0xff]
        %v251 = vld [vmem:[%s1 + $0xb8] sm:$0xff]
        %v252 = vld [vmem:[%s1 + $0xc0] sm:$0xff]
        %v253 = vld [vmem:[%s1 + $0xc8] sm:$0xff]
        %v254 = vld [vmem:[%s1 + $0xd0] sm:$0xff]
        %v255 = vld [vmem:[%s1 + $0xd8] sm:$0xff]
        %v256 = vld [vmem:[%s1 + $0xe0] sm:$0xff]
        %v257 = vld [vmem:[%s1 + $0xe8] sm:$0xff]
        %v258 = vld [vmem:[%s1 + $0xf0] sm:$0xff]
        %v259 = vld [vmem:[%s1 + $0xf8] sm:$0xff]
        %v260 = vld [vmem:[%s1 + $0x100] sm:$0xff]
        %v261 = vld [vmem:[%s1 + $0x108] sm:$0xff]
        %v262 = vld [vmem:[%s1 + $0x110] sm:$0xff]
        %v263 = vld [vmem:[%s1 + $0x118] sm:$0xff]
        %v264 = vld [vmem:[%s1 + $0x120] sm:$0xff]
        %v265 = vld [vmem:[%s1 + $0x128] sm:$0xff]
        %v266 = vld [vmem:[%s1 + $0x130] sm:$0xff]
        %v267 = vld [vmem:[%s1 + $0x138] sm:$0xff]
        %v268 = vld [vmem:[%s1 + $0x140] sm:$0xff]
        %v269 = vld [vmem:[%s1 + $0x148] sm:$0xff]
        %v270 = vld [vmem:[%s1 + $0x150] sm:$0xff]
        %v271 = vld [vmem:[%s1 + $0x158] sm:$0xff]
        %v272 = vld [vmem:[%s1 + $0x160] sm:$0xff]
        %v273 = vld [vmem:[%s1 + $0x168] sm:$0xff]
        %v274 = vld [vmem:[%s1 + $0x170] sm:$0xff]
        %v275 = vld [vmem:[%s1 + $0x178] sm:$0xff]
        %v276 = vld [vmem:[%s1 + $0x180] sm:$0xff]
        %v277 = vld [vmem:[%s1 + $0x188] sm:$0xff]
        %v278 = vld [vmem:[%s1 + $0x190] sm:$0xff]
        %v279 = vld [vmem:[%s1 + $0x198] sm:$0xff]
        %v280 = vld [vmem:[%s1 + $0x1a0] sm:$0xff]
        %v281 = vld [vmem:[%s1 + $0x1a8] sm:$0xff]
        %v282 = vld [vmem:[%s1 + $0x1b0] sm:$0xff]
        %v283 = vld [vmem:[%s1 + $0x1b8] sm:$0xff]
        %v284 = vld [vmem:[%s1 + $0x1c0] sm:$0xff]
        %v285 = vld [vmem:[%s1 + $0x1c8] sm:$0xff]
        %v286 = vld [vmem:[%s1 + $0x1d0] sm:$0xff]
        %v287 = vld [vmem:[%s1 + $0x1d8] sm:$0xff]
        %v288 = vld [vmem:[%s1 + $0x1e0] sm:$0xff]
        %v289 = vld [vmem:[%s1 + $0x1e8] sm:$0xff]
        %v290 = vld [vmem:[%s1 + $0x1f0] sm:$0xff]
        %v291 = vld [vmem:[%s1 + $0x1f8] sm:$0xff]
        %v292 = vld [vmem:[%s1 + $0x200] sm:$0xff]
        %v293 = vld [vmem:[%s1 + $0x208] sm:$0xff]
        %v294 = vld [vmem:[%s1 + $0x210] sm:$0xff]
        %v295 = vld [vmem:[%s1 + $0x218] sm:$0xff]
        %v296 = vld [vmem:[%s1 + $0x220] sm:$0xff]
        %v297 = vld [vmem:[%s1 + $0x228] sm:$0xff]
        %v298 = vld [vmem:[%s1 + $0x230] sm:$0xff]
        %v299 = vld [vmem:[%s1 + $0x238] sm:$0xff]
        %v300 = vld [vmem:[%s1 + $0x240] sm:$0xff]
        %v301 = vld [vmem:[%s1 + $0x248] sm:$0xff]
        %v302 = vld [vmem:[%s1 + $0x250] sm:$0xff]
        %v303 = vld [vmem:[%s1 + $0x258] sm:$0xff]
        %v304 = vld [vmem:[%s1 + $0x260] sm:$0xff]
        %v305 = vld [vmem:[%s1 + $0x268] sm:$0xff]
        %v306 = vld [vmem:[%s1 + $0x270] sm:$0xff]
        %v307 = vld [vmem:[%s1 + $0x278] sm:$0xff]
        %v308 = vld [vmem:[%s1 + $0x280] sm:$0xff]
        %v309 = vld [vmem:[%s1 + $0x288] sm:$0xff]
        %v310 = vld [vmem:[%s1 + $0x290] sm:$0xff]
        %v311 = vld [vmem:[%s1 + $0x298] sm:$0xff]
        %v312 = vld [vmem:[%s1 + $0x2a0] sm:$0xff]
        %v313 = vld [vmem:[%s1 + $0x2a8] sm:$0xff]
        %v314 = vld [vmem:[%s1 + $0x2b0] sm:$0xff]
        %v315 = vld [vmem:[%s1 + $0x2b8] sm:$0xff]
        %v316 = vld [vmem:[%s1 + $0x2c0] sm:$0xff]
        %v317 = vld [vmem:[%s1 + $0x2c8] sm:$0xff]
        %v318 = vld [vmem:[%s1 + $0x2d0] sm:$0xff]
        %v319 = vld [vmem:[%s1 + $0x2d8] sm:$0xff]
        %v320 = vld [vmem:[%s1 + $0x2e0] sm:$0xff]
        %v321 = vld [vmem:[%s1 + $0x2e8] sm:$0xff]
        %v322 = vld [vmem:[%s1 + $0x2f0] sm:$0xff]
        %v323 = vld [vmem:[%s1 + $0x2f8] sm:$0xff]
        %v324 = vld [vmem:[%s1 + $0x300] sm:$0xff]
        %v325 = vld [vmem:[%s1 + $0x308] sm:$0xff]
        %v326 = vld [vmem:[%s1 + $0x310] sm:$0xff]
        %v327 = vld [vmem:[%s1 + $0x318] sm:$0xff]
        %v328 = vld [vmem:[%s1 + $0x320] sm:$0xff]
        %v329 = vld [vmem:[%s1 + $0x328] sm:$0xff]
        %v330 = vld [vmem:[%s1 + $0x330] sm:$0xff]
        %v331 = vld [vmem:[%s1 + $0x338] sm:$0xff]
        %v332 = vld [vmem:[%s1 + $0x340] sm:$0xff]
        %v333 = vld [vmem:[%s1 + $0x348] sm:$0xff]
        %v334 = vld [vmem:[%s1 + $0x350] sm:$0xff]
        %v335 = vld [vmem:[%s1 + $0x358] sm:$0xff]
        %v336 = vld [vmem:[%s1 + $0x360] sm:$0xff]
        %v337 = vld [vmem:[%s1 + $0x368] sm:$0xff]
        %v338 = vld [vmem:[%s1 + $0x370] sm:$0xff]
        %v339 = vld [vmem:[%s1 + $0x378] sm:$0xff]
        %v340 = vld [vmem:[%s1 + $0x380] sm:$0xff]
        %v341 = vld [vmem:[%s1 + $0x388] sm:$0xff]
        %v342 = vld [vmem:[%s1 + $0x390] sm:$0xff]
        %v343 = vld [vmem:[%s1 + $0x398] sm:$0xff]
        %v344 = vld [vmem:[%s1 + $0x3a0] sm:$0xff]
        %v345 = vld [vmem:[%s1 + $0x3a8] sm:$0xff]
        %v346 = vld [vmem:[%s1 + $0x3b0] sm:$0xff]
        %v347 = vld [vmem:[%s1 + $0x3b8] sm:$0xff]
        %v348 = vld [vmem:[%s1 + $0x3c0] sm:$0xff]
        %v349 = vld [vmem:[%s1 + $0x3c8] sm:$0xff]
        %v350 = vld [vmem:[%s1 + $0x3d0] sm:$0xff]
        %v351 = vld [vmem:[%s1 + $0x3d8] sm:$0xff]
        %v352 = vld [vmem:[%s1 + $0x3e0] sm:$0xff]
        %v353 = vld [vmem:[%s1 + $0x3e8] sm:$0xff]
        %v354 = vld [vmem:[%s1 + $0x3f0] sm:$0xff]
        %v355 = vld [vmem:[%s1 + $0x3f8] sm:$0xff]
        %v356 = vld [vmem:[%s1 + $0x400] sm:$0xff]
        %v357 = vld [vmem:[%s1 + $0x408] sm:$0xff]
        %v358 = vld [vmem:[%s1 + $0x410] sm:$0xff]
        %v359 = vld [vmem:[%s1 + $0x418] sm:$0xff]
        %v360 = vld [vmem:[%s1 + $0x420] sm:$0xff]
        %v361 = vld [vmem:[%s1 + $0x428] sm:$0xff]
        %v362 = vld [vmem:[%s1 + $0x430] sm:$0xff]
        %v363 = vld [vmem:[%s1 + $0x438] sm:$0xff]
        %v364 = vld [vmem:[%s1 + $0x440] sm:$0xff]
        %v365 = vld [vmem:[%s1 + $0x448] sm:$0xff]
        %v366 = vld [vmem:[%s1 + $0x450] sm:$0xff]
        %v367 = vld [vmem:[%s1 + $0x458] sm:$0xff]
        %v368 = vld [vmem:[%s1 + $0x460] sm:$0xff]
        %v369 = vld [vmem:[%s1 + $0x468] sm:$0xff]
        %v370 = vld [vmem:[%s1 + $0x470] sm:$0xff]
        %v371 = vld [vmem:[%s1 + $0x478] sm:$0xff]
        %v372 = vld [vmem:[%s1 + $0x480] sm:$0xff]
        %v373 = vld [vmem:[%s1 + $0x488] sm:$0xff]
        %v374 = vld [vmem:[%s1 + $0x490] sm:$0xff]
        %v375 = vld [vmem:[%s1 + $0x498] sm:$0xff]
        %v376 = vld [vmem:[%s1 + $0x4a0] sm:$0xff]
        %v377 = vld [vmem:[%s1 + $0x4a8] sm:$0xff]
        %v378 = vld [vmem:[%s1 + $0x4b0] sm:$0xff]
        %v379 = vld [vmem:[%s1 + $0x4b8] sm:$0xff]
        %v380 = vld [vmem:[%s1 + $0x4c0] sm:$0xff]
        %v381 = vld [vmem:[%s1 + $0x4c8] sm:$0xff]
        %v382 = vld [vmem:[%s1 + $0x4d0] sm:$0xff]
        %v383 = vld [vmem:[%s1 + $0x4d8] sm:$0xff]
        %v384 = vld [vmem:[%s1 + $0x4e0] sm:$0xff]
        %v385 = vld [vmem:[%s1 + $0x4e8] sm:$0xff]
        %v386 = vld [vmem:[%s1 + $0x4f0] sm:$0xff]
        %v387 = vld [vmem:[%s1 + $0x4f8] sm:$0xff]
        %v388 = vld [vmem:[%s2] sm:$0x1]
        %v390 = vperm.slane %v388, 0
        %392 = vmatpush.msra.mxu0 %v243
        %393 = vmatpush.msra.mxu0 %v242
        %394 = vmatpush.msra.mxu0 %v241
        %395 = vmatpush.msra.mxu0 %v240
        %396 = vmatpush.msra.mxu0 %v239
        %397 = vmatpush.msra.mxu0 %v238
        %398 = vmatpush.msra.mxu0 %v237
        %399 = vmatpush.msra.mxu0 %v236
        %400 = vmatpush.msra.mxu0 %v235
        %401 = vmatpush.msra.mxu0 %v234
        %402 = vmatpush.msra.mxu0 %v233
        %403 = vmatpush.msra.mxu0 %v232
        %404 = vmatpush.msra.mxu0 %v231
        %405 = vmatpush.msra.mxu0 %v230
        %406 = vmatpush.msra.mxu0 %v229
        %407 = vmatpush.msra.mxu0 %v228
        %408 = vmatmul.f32.gmra.mxu0 %v208
        %v409 = vpop.f32.mrf.mxu0
        %v410 = vadd.f32 %v390, %v409
        %411 = vmatmul.f32.gmra.mxu0 %v218
        %v412 = vpop.f32.mrf.mxu0
        %v413 = vadd.f32 %v390, %v412
        %414 = vdwg.mxu0
        %415 = vmatpush.msra.mxu0 %v259
        %416 = vmatpush.msra.mxu0 %v258
        %417 = vmatpush.msra.mxu0 %v257
        %418 = vmatpush.msra.mxu0 %v256
        %419 = vmatpush.msra.mxu0 %v255
        %420 = vmatpush.msra.mxu0 %v254
        %421 = vmatpush.msra.mxu0 %v253
        %422 = vmatpush.msra.mxu0 %v252
        %423 = vmatpush.msra.mxu0 %v251
        %424 = vmatpush.msra.mxu0 %v250
        %425 = vmatpush.msra.mxu0 %v249
        %426 = vmatpush.msra.mxu0 %v248
        %427 = vmatpush.msra.mxu0 %v247
        %428 = vmatpush.msra.mxu0 %v246
        %429 = vmatpush.msra.mxu0 %v245
        %430 = vmatpush.msra.mxu0 %v244
        %431 = vmatmul.f32.gmra.mxu0 %v209
        %v432 = vpop.f32.mrf.mxu0
        %v433 = vadd.f32 %v410, %v432
        %434 = vmatmul.f32.gmra.mxu0 %v219
        %v435 = vpop.f32.mrf.mxu0
        %v436 = vadd.f32 %v413, %v435
        %437 = vdwg.mxu0
        %438 = vmatpush.msra.mxu0 %v275
        %439 = vmatpush.msra.mxu0 %v274
        %440 = vmatpush.msra.mxu0 %v273
        %441 = vmatpush.msra.mxu0 %v272
        %442 = vmatpush.msra.mxu0 %v271
        %443 = vmatpush.msra.mxu0 %v270
        %444 = vmatpush.msra.mxu0 %v269
        %445 = vmatpush.msra.mxu0 %v268
        %446 = vmatpush.msra.mxu0 %v267
        %447 = vmatpush.msra.mxu0 %v266
        %448 = vmatpush.msra.mxu0 %v265
        %449 = vmatpush.msra.mxu0 %v264
        %450 = vmatpush.msra.mxu0 %v263
        %451 = vmatpush.msra.mxu0 %v262
        %452 = vmatpush.msra.mxu0 %v261
        %453 = vmatpush.msra.mxu0 %v260
        %454 = vmatmul.f32.gmra.mxu0 %v210
        %v455 = vpop.f32.mrf.mxu0
        %v456 = vadd.f32 %v433, %v455
        %457 = vmatmul.f32.gmra.mxu0 %v220
        %v458 = vpop.f32.mrf.mxu0
        %v459 = vadd.f32 %v436, %v458
        %460 = vdwg.mxu0
        %461 = vmatpush.msra.mxu0 %v291
        %462 = vmatpush.msra.mxu0 %v290
        %463 = vmatpush.msra.mxu0 %v289
        %464 = vmatpush.msra.mxu0 %v288
        %465 = vmatpush.msra.mxu0 %v287
        %466 = vmatpush.msra.mxu0 %v286
        %467 = vmatpush.msra.mxu0 %v285
        %468 = vmatpush.msra.mxu0 %v284
        %469 = vmatpush.msra.mxu0 %v283
        %470 = vmatpush.msra.mxu0 %v282
        %471 = vmatpush.msra.mxu0 %v281
        %472 = vmatpush.msra.mxu0 %v280
        %473 = vmatpush.msra.mxu0 %v279
        %474 = vmatpush.msra.mxu0 %v278
        %475 = vmatpush.msra.mxu0 %v277
        %476 = vmatpush.msra.mxu0 %v276
        %477 = vmatmul.f32.gmra.mxu0 %v211
        %v478 = vpop.f32.mrf.mxu0
        %v479 = vadd.f32 %v456, %v478
        %480 = vmatmul.f32.gmra.mxu0 %v221
        %v481 = vpop.f32.mrf.mxu0
        %v482 = vadd.f32 %v459, %v481
        %483 = vdwg.mxu0
        %484 = vmatpush.msra.mxu0 %v307
        %485 = vmatpush.msra.mxu0 %v306
        %486 = vmatpush.msra.mxu0 %v305
        %487 = vmatpush.msra.mxu0 %v304
        %488 = vmatpush.msra.mxu0 %v303
        %489 = vmatpush.msra.mxu0 %v302
        %490 = vmatpush.msra.mxu0 %v301
        %491 = vmatpush.msra.mxu0 %v300
        %492 = vmatpush.msra.mxu0 %v299
        %493 = vmatpush.msra.mxu0 %v298
        %494 = vmatpush.msra.mxu0 %v297
        %495 = vmatpush.msra.mxu0 %v296
        %496 = vmatpush.msra.mxu0 %v295
        %497 = vmatpush.msra.mxu0 %v294
        %498 = vmatpush.msra.mxu0 %v293
        %499 = vmatpush.msra.mxu0 %v292
        %500 = vmatmul.f32.gmra.mxu0 %v212
        %v501 = vpop.f32.mrf.mxu0
        %v502 = vadd.f32 %v479, %v501
        %503 = vmatmul.f32.gmra.mxu0 %v222
        %v504 = vpop.f32.mrf.mxu0
        %v505 = vadd.f32 %v482, %v504
        %506 = vdwg.mxu0
        %507 = vmatpush.msra.mxu0 %v323
        %508 = vmatpush.msra.mxu0 %v322
        %509 = vmatpush.msra.mxu0 %v321
        %510 = vmatpush.msra.mxu0 %v320
        %511 = vmatpush.msra.mxu0 %v319
        %512 = vmatpush.msra.mxu0 %v318
        %513 = vmatpush.msra.mxu0 %v317
        %514 = vmatpush.msra.mxu0 %v316
        %515 = vmatpush.msra.mxu0 %v315
        %516 = vmatpush.msra.mxu0 %v314
        %517 = vmatpush.msra.mxu0 %v313
        %518 = vmatpush.msra.mxu0 %v312
        %519 = vmatpush.msra.mxu0 %v311
        %520 = vmatpush.msra.mxu0 %v310
        %521 = vmatpush.msra.mxu0 %v309
        %522 = vmatpush.msra.mxu0 %v308
        %523 = vmatmul.f32.gmra.mxu0 %v213
        %v524 = vpop.f32.mrf.mxu0
        %v525 = vadd.f32 %v502, %v524
        %526 = vmatmul.f32.gmra.mxu0 %v223
        %v527 = vpop.f32.mrf.mxu0
        %v528 = vadd.f32 %v505, %v527
        %529 = vdwg.mxu0
        %530 = vmatpush.msra.mxu0 %v339
        %531 = vmatpush.msra.mxu0 %v338
        %532 = vmatpush.msra.mxu0 %v337
        %533 = vmatpush.msra.mxu0 %v336
        %534 = vmatpush.msra.mxu0 %v335
        %535 = vmatpush.msra.mxu0 %v334
        %536 = vmatpush.msra.mxu0 %v333
        %537 = vmatpush.msra.mxu0 %v332
        %538 = vmatpush.msra.mxu0 %v331
        %539 = vmatpush.msra.mxu0 %v330
        %540 = vmatpush.msra.mxu0 %v329
        %541 = vmatpush.msra.mxu0 %v328
        %542 = vmatpush.msra.mxu0 %v327
        %543 = vmatpush.msra.mxu0 %v326
        %544 = vmatpush.msra.mxu0 %v325
        %545 = vmatpush.msra.mxu0 %v324
        %546 = vmatmul.f32.gmra.mxu0 %v214
        %v547 = vpop.f32.mrf.mxu0
        %v548 = vadd.f32 %v525, %v547
        %549 = vmatmul.f32.gmra.mxu0 %v224
        %v550 = vpop.f32.mrf.mxu0
        %v551 = vadd.f32 %v528, %v550
        %552 = vdwg.mxu0
        %553 = vmatpush.msra.mxu0 %v355
        %554 = vmatpush.msra.mxu0 %v354
        %555 = vmatpush.msra.mxu0 %v353
        %556 = vmatpush.msra.mxu0 %v352
        %557 = vmatpush.msra.mxu0 %v351
        %558 = vmatpush.msra.mxu0 %v350
        %559 = vmatpush.msra.mxu0 %v349
        %560 = vmatpush.msra.mxu0 %v348
        %561 = vmatpush.msra.mxu0 %v347
        %562 = vmatpush.msra.mxu0 %v346
        %563 = vmatpush.msra.mxu0 %v345
        %564 = vmatpush.msra.mxu0 %v344
        %565 = vmatpush.msra.mxu0 %v343
        %566 = vmatpush.msra.mxu0 %v342
        %567 = vmatpush.msra.mxu0 %v341
        %568 = vmatpush.msra.mxu0 %v340
        %569 = vmatmul.f32.gmra.mxu0 %v215
        %v570 = vpop.f32.mrf.mxu0
        %v571 = vadd.f32 %v548, %v570
        %572 = vmatmul.f32.gmra.mxu0 %v225
        %v573 = vpop.f32.mrf.mxu0
        %v574 = vadd.f32 %v551, %v573
        %575 = vdwg.mxu0
        %576 = vmatpush.msra.mxu0 %v371
        %577 = vmatpush.msra.mxu0 %v370
        %578 = vmatpush.msra.mxu0 %v369
        %579 = vmatpush.msra.mxu0 %v368
        %580 = vmatpush.msra.mxu0 %v367
        %581 = vmatpush.msra.mxu0 %v366
        %582 = vmatpush.msra.mxu0 %v365
        %583 = vmatpush.msra.mxu0 %v364
        %584 = vmatpush.msra.mxu0 %v363
        %585 = vmatpush.msra.mxu0 %v362
        %586 = vmatpush.msra.mxu0 %v361
        %587 = vmatpush.msra.mxu0 %v360
        %588 = vmatpush.msra.mxu0 %v359
        %589 = vmatpush.msra.mxu0 %v358
        %590 = vmatpush.msra.mxu0 %v357
        %591 = vmatpush.msra.mxu0 %v356
        %592 = vmatmul.f32.gmra.mxu0 %v216
        %v593 = vpop.f32.mrf.mxu0
        %v594 = vadd.f32 %v571, %v593
        %595 = vmatmul.f32.gmra.mxu0 %v226
        %v596 = vpop.f32.mrf.mxu0
        %v597 = vadd.f32 %v574, %v596
        %598 = vdwg.mxu0
        %599 = vmatpush.msra.mxu0 %v387
        %600 = vmatpush.msra.mxu0 %v386
        %601 = vmatpush.msra.mxu0 %v385
        %602 = vmatpush.msra.mxu0 %v384
        %603 = vmatpush.msra.mxu0 %v383
        %604 = vmatpush.msra.mxu0 %v382
        %605 = vmatpush.msra.mxu0 %v381
        %606 = vmatpush.msra.mxu0 %v380
        %607 = vmatpush.msra.mxu0 %v379
        %608 = vmatpush.msra.mxu0 %v378
        %609 = vmatpush.msra.mxu0 %v377
        %610 = vmatpush.msra.mxu0 %v376
        %611 = vmatpush.msra.mxu0 %v375
        %612 = vmatpush.msra.mxu0 %v374
        %613 = vmatpush.msra.mxu0 %v373
        %614 = vmatpush.msra.mxu0 %v372
        %615 = vmatmul.f32.gmra.mxu0 %v217
        %v616 = vpop.f32.mrf.mxu0
        %v617 = vadd.f32 %v594, %v616
        %618 = vmatmul.f32.gmra.mxu0 %v227
        %v619 = vpop.f32.mrf.mxu0
        %v620 = vadd.f32 %v597, %v619
        %621 = vdwg.mxu0
        %vm622 = vcmask 80896
        %v623 = vsel %vm622, %v617, 0.0
        %vm624 = vcmask 73728
        %v625 = vsel %vm624, %v620, 0.0
        %v626 = vadd.f32 %v623, %v625
        %v627 = vrot.slane %v626, 4
        %v628 = vadd.f32 %v626, %v627
        %v629 = vrot.slane %v628, 2
        %v630 = vadd.f32 %v628, %v629
        %v631 = vrot.slane %v630, 1
        %v632 = vadd.f32 %v630, %v631
        %v633 = vmul.f32 %v632, 0.11111111
        %634 = vst.msk [vmem:[%s190] sm:$0x1] %vm624, %v633
        %637 = vrot.lane.b32.xlu0 %v617, 118
        %v638 = vpop.permute.xlu0 %637
        %639 = vrot.lane.b32.xlu0 %v620, 118
        %v640 = vpop.permute.xlu0 %639
        %vm643 = vcmask 7168
        %644 = vst.msk [vmem:[%s207] sm:$0xff] %vm643, %v638
        %vm645 = vcmask 0
        %646 = vst.msk [vmem:[%s207 + $0x8] sm:$0x1] %vm645, %v640
        %s647 = sand.u32 %s95, 1
        %s648 = scalar_lea.sflag [#allocation3], %s647
        %s649 = sand.u32 %s95, 1
        %s650 = scalar_lea.vmem [#allocation2], %s649
        %p651 = scmp.lt.s32.totalorder %s19, 1
        %s652 = scalar_select %p651, %s19, 1
        %s653 = smul.addr %s652, 2
        %s654 = smul.addr %s653, 8
        %s655 = scalar_lea.vmem %s4, %s654
        // Predicated region
        $region33: #{tpu_custom_call.1} parent=31 // pred_check
          %p656 = pneg %p105
        $region34: #{tpu_custom_call.1} parent=31 // pred_check_branch
          %658 = sbr.rel (%p656) target = $region36
        $region35: #{tpu_custom_call.1} parent=31 // pred_region
          %660 = vsyncadd %s648, 0
          %s661 = scalar_lea.hbm %s3, %s19
          %s663 = sshll.u32 %s650, 4
          %s664 = int_to_ptr.vmem [resolvable:$true] %s663
          %s665 = sshll.u32 %s661, 4
          %s666 = int_to_ptr.hbm [resolvable:$true] %s665
          %668 = dma.vmem_to_hbm [thread:$0]  %s664, 16, %s666, %s648
        $region36: #{tpu_custom_call.1} parent=31 // pred_fallthru
          _
        // Predicated region
        $region37: #{tpu_custom_call.1} parent=31 // pred_check
          %p669 = pneg %p131
        $region38: #{tpu_custom_call.1} parent=31 // pred_check_branch
          %671 = sbr.rel (%p669) target = $region40
        $region39: #{tpu_custom_call.1} parent=31 // pred_region
          _
        $region40: #{tpu_custom_call.1} parent=31 // pred_fallthru
          _
      $region32: #{tpu_custom_call.1} parent=5 // pred_fallthru
        _
      %p672 = scmp.le.s32.totalorder 2, %s14
      // Predicated region
      $region41: #{tpu_custom_call.1} parent=5 // pred_check
        %p673 = pneg %p672
      $region42: #{tpu_custom_call.1} parent=5 // pred_check_branch
        %675 = sbr.rel (%p673) target = $region44
      $region43: #{tpu_custom_call.1} parent=5 // pred_region
        %s676 = ssub.s32 %s14, 2
        // Predicated region
        $region45: #{tpu_custom_call.1} parent=43 // pred_check
          %p677 = pneg %p111
        $region46: #{tpu_custom_call.1} parent=43 // pred_check_branch
          %679 = sbr.rel (%p677) target = $region48
        $region47: #{tpu_custom_call.1} parent=43 // pred_region
          %s680 = sand.u32 %s96, 1
          %s681 = scalar_lea.sflag [#allocation3], %s680
          %s682 = sand.u32 %s96, 1
          %s683 = scalar_lea.vmem [#allocation2], %s682
          %685 = dma.done %s681, 16
        $region48: #{tpu_custom_call.1} parent=43 // pred_fallthru
          _
        // Predicated region
        $region49: #{tpu_custom_call.1} parent=43 // pred_check
          %p686 = pneg %p137
        $region50: #{tpu_custom_call.1} parent=43 // pred_check_branch
          %688 = sbr.rel (%p686) target = $region52
        $region51: #{tpu_custom_call.1} parent=43 // pred_region
          %p689 = scmp.lt.s32.totalorder %s20, 1
          %s690 = scalar_select %p689, %s20, 1
          %s691 = smul.addr %s690, 2
          %s692 = smul.addr %s691, 8
          %s693 = scalar_lea.vmem %s4, %s692
        $region52: #{tpu_custom_call.1} parent=43 // pred_fallthru
          _
      $region44: #{tpu_custom_call.1} parent=5 // pred_fallthru
        _
    $region6: #{tpu_custom_call.1} parent=1 // loop_footer
      %s18 = sadd.s32 1, %s14
    $region7: #{tpu_custom_call.1} parent=1 // loop_footer_branch
      %13 = sbr.rel target = $region3
    $region8: #{tpu_custom_call.1} parent=1 // loop_exit
      _
    %694 = vsyncpa [#allocation3], 1
    %s695 = scalar_lea.sflag [#allocation3], 1
    %696 = vsyncpa %s695, 1

</llo_original>
